<compile_context>
chip_gen: v7x
topology: tpu7x:2x2x1
jax: 0.10.0
libtpu: 0.0.40
codegen_flags: <defaults>
</compile_context>

<pallas_src>
import functools

import jax
import jax.numpy as jnp
from jax.experimental import pallas as pl
from jax.experimental.pallas import tpu as pltpu

_LANE = 128
_SUBLANE = 8
_MiB = 1024 * 1024


def _round_up(v, m):
    return (v + m - 1) // m * m


def _tpu_vmem_and_multicore():
    """Returns (physical VMEM bytes, chip has >1 TensorCore)."""
    vmem = 128 * _MiB
    try:
        vmem = int(pltpu.get_tpu_info().vmem_capacity_bytes)
    except Exception:
        pass
    multi_tc = vmem <= 64 * _MiB  # v7x heuristic (64 MiB VMEM, 2 TCs)
    try:
        kind = jax.devices()[0].device_kind.lower()
        if "v7" in kind:
            multi_tc = True
    except Exception:
        pass
    return vmem, multi_tc


def _largest_divisor_leq(n, cap):
    cap = max(1, min(n, cap))
    for d in range(cap, 0, -1):
        if n % d == 0:
            return d
    return 1


def _choose_channel_tile(C, max_rows):
    """Largest divisor of C that is a legal sublane tile (multiple of 8, or C
    itself) and fits `max_rows`; falls back to the smallest legal tile."""
    legal = [d for d in range(1, C + 1)
             if C % d == 0 and (d % _SUBLANE == 0 or d == C)]
    fitting = [d for d in legal if d <= max_rows]
    return max(fitting) if fitting else min(legal)


def _excite(pooled, w1t, b1, w2t, b2):
    """(rows, C) -> (rows, C) channel attention; 1/(H*W) folded into w1t."""
    h = jnp.dot(pooled, w1t, preferred_element_type=jnp.float32) + b1
    h = jnp.maximum(h, 0.0)                                  # ReLU
    y = jnp.dot(h, w2t, preferred_element_type=jnp.float32) + b2
    return jax.nn.sigmoid(y)


# ----------------------------------------------------------------------------
# Fused single-pass kernel: pool + excite + rescale for `nb` whole images.
# ----------------------------------------------------------------------------
def _se_fused_kernel(x_ref, w1t_ref, b1_ref, w2t_ref, b2_ref, o_ref):
    # Batched over the whole (nb, C, HW) tile: no per-image unroll, no
    # transposes, and the data slab is never copied to f32.
    pooled = jnp.sum(x_ref[...], axis=-1, dtype=jnp.float32)          # (nb, C)
    y = _excite(pooled, w1t_ref[...], b1_ref[...], w2t_ref[...], b2_ref[...])
    o_ref[...] = x_ref[...] * y[:, :, None].astype(o_ref.dtype)


# ----------------------------------------------------------------------------
# Fallback kernels (one image slab does not fit the per-step VMEM budget).
# ----------------------------------------------------------------------------
def _pool_kernel(x_ref, p_ref):
    # (1, tc, HW) -> (1, tc, 1) raw sum (the 1/(H*W) factor lives in w1t).
    p_ref[...] = jnp.sum(x_ref[...], axis=-1, keepdims=True, dtype=jnp.float32)


def _excite_kernel(p_ref, w1t_ref, b1_ref, w2t_ref, b2_ref, y_ref):
    pooled_row = p_ref[0].T                                            # (1, C)
    y = _excite(pooled_row, w1t_ref[...], b1_ref[...], w2t_ref[...], b2_ref[...])
    y_ref[0] = y.T.astype(y_ref.dtype)                                 # (C, 1)


def _rescale_kernel(x_ref, y_ref, o_ref):
    o_ref[...] = x_ref[...] * y_ref[...].astype(o_ref.dtype)


# ----------------------------------------------------------------------------
# Wrapper
# ----------------------------------------------------------------------------
@functools.partial(jax.jit, static_argnames=("block_budget_bytes",))
def se_layer(x, w1, b1, w2, b2, *, block_budget_bytes=None):
    """SELayer forward.  x: (N, C, H, W); w1: (C//r, C); b1: (C//r,);
    w2: (C, C//r); b2: (C,).  Returns (N, C, H, W) in x.dtype."""
    N, C, H, W = x.shape
    Cr = w1.shape[0]
    HW = H * W
    itemsize = jnp.dtype(x.dtype).itemsize

    vmem_cap, multi_tc = _tpu_vmem_and_multicore()
    # ~3/8 of physical VMEM per pipelined step (24 MiB on v7x, 48 MiB on
    # v5e/v6e); the ceiling leaves headroom for Mosaic internal scratch.
    if block_budget_bytes is None:
        block_budget_bytes = 3 * vmem_cap // 8
    vmem_ceiling = 3 * vmem_cap // 4

    # Row-oriented FC params; fold the 1/(H*W) mean factor into w1.
    w1t = (w1.astype(jnp.float32) * (1.0 / float(HW))).T               # (C, Cr)
    b1r = b1.astype(jnp.float32).reshape(1, Cr)
    w2t = w2.astype(jnp.float32).T                                     # (Cr, C)
    b2r = b2.astype(jnp.float32).reshape(1, C)
    weight_bytes = 2 * 4 * (2 * C * Cr + C + Cr)                       # resident x2

    x3 = x.reshape(N, C, HW)            # free relabel: no copy, no padding
    # VMEM footprint of one image slab (in + out, each double buffered),
    # including the buffers' internal sublane/lane padding.
    c_pad = _round_up(C, _SUBLANE)
    hw_pad = _round_up(HW, _LANE)
    per_image_bytes = 4 * c_pad * hw_pad * itemsize

    def _limit(active_bytes):
        return int(min(vmem_ceiling,
                       max(16 * _MiB, active_bytes + weight_bytes + 2 * _MiB)))

    if per_image_bytes <= block_budget_bytes:
        # -------- fused single pass: pool + excite + rescale ----------------
        nb_cap = block_budget_bytes // per_image_bytes
        if multi_tc and N >= 2:
            # Keep grid extent >= 2 so both v7x TensorCores stream data.
            nb_cap = min(nb_cap, N // 2)
        nb = _largest_divisor_leq(N, nb_cap)
        grid = (N // nb,)

        out = pl.pallas_call(
            _se_fused_kernel,
            out_shape=jax.ShapeDtypeStruct((N, C, HW), x.dtype),
            grid_spec=pltpu.PrefetchScalarGridSpec(
                num_scalar_prefetch=0,
                grid=grid,
                in_specs=[
                    pl.BlockSpec((nb, C, HW), lambda n: (n, 0, 0)),    # x tile
                    pl.BlockSpec((C, Cr), lambda n: (0, 0)),           # w1t
                    pl.BlockSpec((1, Cr), lambda n: (0, 0)),           # b1
                    pl.BlockSpec((Cr, C), lambda n: (0, 0)),           # w2t
                    pl.BlockSpec((1, C), lambda n: (0, 0)),            # b2
                ],
                out_specs=pl.BlockSpec((nb, C, HW), lambda n: (n, 0, 0)),
            ),
            compiler_params=pltpu.CompilerParams(
                dimension_semantics=("parallel",),
                vmem_limit_bytes=_limit(nb * per_image_bytes)),
        )(x3, w1t, b1r, w2t, b2r)
        return out.reshape(N, C, H, W)

    # -------- fallback: channel-tiled pool -> tiny excite -> rescale --------
    # TODO(synk): truly gigantic H*W (an 8-channel slab exceeding VMEM) would
    # additionally need spatial tiling of the pool; not needed for RCAN sizes.
    per_row_bytes = hw_pad * itemsize
    tc_pool = _choose_channel_tile(C, block_budget_bytes // (2 * per_row_bytes))
    tc_scale = _choose_channel_tile(C, block_budget_bytes // (4 * per_row_bytes))

    # Pass 1: per-(image, channel-tile) sum pool, fully parallel.
    pooled = pl.pallas_call(
        _pool_kernel,
        out_shape=jax.ShapeDtypeStruct((N, C, 1), jnp.float32),
        grid_spec=pltpu.PrefetchScalarGridSpec(
            num_scalar_prefetch=0,
            grid=(N, C // tc_pool),
            in_specs=[pl.BlockSpec((1, tc_pool, HW), lambda n, c: (n, c, 0))],
            out_specs=pl.BlockSpec((1, tc_pool, 1), lambda n, c: (n, c, 0)),
        ),
        compiler_params=pltpu.CompilerParams(
            dimension_semantics=("parallel", "parallel"),
            vmem_limit_bytes=_limit(2 * tc_pool * per_row_bytes)),
    )(x3)

    # Pass 2: tiny per-image excitation (1x1 convs + ReLU + sigmoid).
    y = pl.pallas_call(
        _excite_kernel,
        out_shape=jax.ShapeDtypeStruct((N, C, 1), jnp.float32),
        grid_spec=pltpu.PrefetchScalarGridSpec(
            num_scalar_prefetch=0,
            grid=(N,),
            in_specs=[
                pl.BlockSpec((1, C, 1), lambda n: (n, 0, 0)),
                pl.BlockSpec((C, Cr), lambda n: (0, 0)),
                pl.BlockSpec((1, Cr), lambda n: (0, 0)),
                pl.BlockSpec((Cr, C), lambda n: (0, 0)),
                pl.BlockSpec((1, C), lambda n: (0, 0)),
            ],
            out_specs=pl.BlockSpec((1, C, 1), lambda n: (n, 0, 0)),
        ),
        compiler_params=pltpu.CompilerParams(
            dimension_semantics=("parallel",)),
    )(pooled, w1t, b1r, w2t, b2r)

    # Pass 3: channel-wise rescale, fully parallel over (image, channel tile).
    out = pl.pallas_call(
        _rescale_kernel,
        out_shape=jax.ShapeDtypeStruct((N, C, HW), x.dtype),
        grid_spec=pltpu.PrefetchScalarGridSpec(
            num_scalar_prefetch=0,
            grid=(N, C // tc_scale),
            in_specs=[
                pl.BlockSpec((1, tc_scale, HW), lambda n, c: (n, c, 0)),
                pl.BlockSpec((1, tc_scale, 1), lambda n, c: (n, c, 0)),
            ],
            out_specs=pl.BlockSpec((1, tc_scale, HW), lambda n, c: (n, c, 0)),
        ),
        compiler_params=pltpu.CompilerParams(
            dimension_semantics=("parallel", "parallel"),
            vmem_limit_bytes=_limit(4 * tc_scale * per_row_bytes)),
    )(x3, y)
    return out.reshape(N, C, H, W)


def _reference(x, w1, b1, w2, b2):
    # Pure-JAX reference of the PyTorch forward.
    pooled = jnp.mean(x, axis=(2, 3))                     # (N, C)
    h = jnp.maximum(pooled @ w1.T + b1, 0.0)              # (N, Cr)
    y = jax.nn.sigmoid(h @ w2.T + b2)                     # (N, C)
    return x * y[:, :, None, None]


if __name__ == "__main__":
    # Shapes consistent with SELayer(channel=32, reduction=16).
    N, C, reduction = 2, 32, 16
    Cr = C // reduction

    key = jax.random.PRNGKey(0)
    kx1, kx2, k1, kb1, k2, kb2 = jax.random.split(key, 6)

    bound1 = 1.0 / (C ** 0.5)
    w1 = jax.random.uniform(k1, (Cr, C), jnp.float32, -bound1, bound1)
    b1 = jax.random.uniform(kb1, (Cr,), jnp.float32, -bound1, bound1)
    bound2 = 1.0 / (Cr ** 0.5)
    w2 = jax.random.uniform(k2, (C, Cr), jnp.float32, -bound2, bound2)
    b2 = jax.random.uniform(kb2, (C,), jnp.float32, -bound2, bound2)

    xa = jax.random.normal(kx1, (N, C, 16, 16), jnp.float32)   # HW = 256 (aligned)
    xb = jax.random.normal(kx2, (N, C, 10, 10), jnp.float32)   # HW = 100 (ragged)
    ra = _reference(xa, w1, b1, w2, b2)
    rb = _reference(xb, w1, b1, w2, b2)

    # 1) Fused single-pass path, HW a multiple of 128.
    oa = jax.block_until_ready(se_layer(xa, w1, b1, w2, b2))
    assert oa.shape == xa.shape
    assert jnp.allclose(oa, ra, atol=1e-5, rtol=1e-5), "single-pass mismatch"

    # 2) Fused single-pass path, ragged HW (masked tail lanes, no host pad).
    ob = jax.block_until_ready(se_layer(xb, w1, b1, w2, b2))
    assert ob.shape == xb.shape
    assert jnp.allclose(ob, rb, atol=1e-5, rtol=1e-5), "ragged single-pass mismatch"

    # 3) Force the channel-tiled fallback with a tiny per-step budget.
    oc = jax.block_until_ready(se_layer(xa, w1, b1, w2, b2,
                                        block_budget_bytes=16 * 1024))
    assert jnp.allclose(oc, ra, atol=1e-5, rtol=1e-5), "fallback mismatch"
    od = jax.block_until_ready(se_layer(xb, w1, b1, w2, b2,
                                        block_budget_bytes=16 * 1024))
    assert jnp.allclose(od, rb, atol=1e-5, rtol=1e-5), "ragged fallback mismatch"

    print("KERNEL_OK")
</pallas_src>

<mosaic_0001>
module attributes {stable_mosaic.version = 11 : i64} {
  func.func @_se_fused_kernel(%arg0: i32, %arg1: memref<2x32x256xf32, #tpu.memory_space<vmem>>, %arg2: memref<32x2xf32, #tpu.memory_space<vmem>>, %arg3: memref<1x2xf32, #tpu.memory_space<vmem>>, %arg4: memref<2x32xf32, #tpu.memory_space<vmem>>, %arg5: memref<1x32xf32, #tpu.memory_space<vmem>>, %arg6: memref<2x32x256xf32, #tpu.memory_space<vmem>>) attributes {dimension_semantics = [#tpu.dimension_semantics<parallel>], iteration_bounds = array<i64: 1>, scalar_prefetch = 0 : i64, scratch_operands = 0 : i64, tpu.core_type = #tpu.core_type<tc>, window_params = [{transform_indices = @transform_0, window_bounds = array<i64: 2, 32, 256>}, {pipeline_mode = #tpu.pipeline_mode<synchronous>, transform_indices = @transform_1, window_bounds = array<i64: 32, 2>}, {pipeline_mode = #tpu.pipeline_mode<synchronous>, transform_indices = @transform_2, window_bounds = array<i64: 1, 2>}, {pipeline_mode = #tpu.pipeline_mode<synchronous>, transform_indices = @transform_3, window_bounds = array<i64: 2, 32>}, {pipeline_mode = #tpu.pipeline_mode<synchronous>, transform_indices = @transform_4, window_bounds = array<i64: 1, 32>}, {transform_indices = @transform_5, window_bounds = array<i64: 2, 32, 256>}]} {
    %c0 = arith.constant 0 : index
    %c0_0 = arith.constant 0 : index
    %c0_1 = arith.constant 0 : index
    %0 = vector.load %arg1[%c0, %c0_0, %c0_1] : memref<2x32x256xf32, #tpu.memory_space<vmem>>, vector<2x32x256xf32>
    %cst = arith.constant dense<0.000000e+00> : vector<2x32xf32>
    %1 = vector.multi_reduction <add>, %0, %cst [2] : vector<2x32x256xf32> to vector<2x32xf32>
    %c0_2 = arith.constant 0 : index
    %c0_3 = arith.constant 0 : index
    %2 = vector.load %arg2[%c0_2, %c0_3] : memref<32x2xf32, #tpu.memory_space<vmem>>, vector<32x2xf32>
    %c0_4 = arith.constant 0 : index
    %c0_5 = arith.constant 0 : index
    %3 = vector.load %arg3[%c0_4, %c0_5] : memref<1x2xf32, #tpu.memory_space<vmem>>, vector<1x2xf32>
    %c0_6 = arith.constant 0 : index
    %c0_7 = arith.constant 0 : index
    %4 = vector.load %arg4[%c0_6, %c0_7] : memref<2x32xf32, #tpu.memory_space<vmem>>, vector<2x32xf32>
    %c0_8 = arith.constant 0 : index
    %c0_9 = arith.constant 0 : index
    %5 = vector.load %arg5[%c0_8, %c0_9] : memref<1x32xf32, #tpu.memory_space<vmem>>, vector<1x32xf32>
    %cst_10 = arith.constant dense<0.000000e+00> : vector<2x2xf32>
    %6 = tpu.matmul %1, %2, %cst_10 {dimension_numbers = #tpu.dot_dimension_numbers<[1], [0], [0], [1], [0, 0, 1, 1], [], []>} : vector<2x32xf32>, vector<32x2xf32>, vector<2x2xf32> -> vector<2x2xf32>
    %7 = vector.broadcast %3 : vector<1x2xf32> to vector<2x2xf32>
    %8 = arith.addf %6, %7 : vector<2x2xf32>
    %cst_11 = arith.constant 0.000000e+00 : f32
    %9 = vector.broadcast %cst_11 : f32 to vector<2x2xf32>
    %10 = arith.maximumf %8, %9 : vector<2x2xf32>
    %cst_12 = arith.constant dense<0.000000e+00> : vector<2x32xf32>
    %11 = tpu.matmul %10, %4, %cst_12 {dimension_numbers = #tpu.dot_dimension_numbers<[1], [0], [0], [1], [0, 0, 1, 1], [], []>} : vector<2x2xf32>, vector<2x32xf32>, vector<2x32xf32> -> vector<2x32xf32>
    %12 = vector.broadcast %5 : vector<1x32xf32> to vector<2x32xf32>
    %13 = arith.addf %11, %12 : vector<2x32xf32>
    %14 = arith.negf %13 : vector<2x32xf32>
    %15 = math.exp %14 : vector<2x32xf32>
    %cst_13 = arith.constant 1.000000e+00 : f32
    %16 = vector.broadcast %cst_13 : f32 to vector<2x32xf32>
    %17 = arith.addf %16, %15 : vector<2x32xf32>
    %18 = arith.divf %16, %17 : vector<2x32xf32>
    %c0_14 = arith.constant 0 : index
    %c0_15 = arith.constant 0 : index
    %c0_16 = arith.constant 0 : index
    %19 = vector.load %arg1[%c0_14, %c0_15, %c0_16] : memref<2x32x256xf32, #tpu.memory_space<vmem>>, vector<2x32x256xf32>
    %20 = vector.shape_cast %18 : vector<2x32xf32> to vector<2x32x1xf32>
    %21 = vector.broadcast %20 : vector<2x32x1xf32> to vector<2x32x256xf32>
    %22 = arith.mulf %19, %21 : vector<2x32x256xf32>
    %c0_17 = arith.constant 0 : index
    %c0_18 = arith.constant 0 : index
    %c0_19 = arith.constant 0 : index
    %23 = vector.load %arg6[%c0_17, %c0_18, %c0_19] : memref<2x32x256xf32, #tpu.memory_space<vmem>>, vector<2x32x256xf32>
    tpu.vector_store %arg6[%c0_17, %c0_18, %c0_19], %22 {strides = array<i32>} : memref<2x32x256xf32, #tpu.memory_space<vmem>>, vector<2x32x256xf32>,
    return
  }
  func.func @transform_0(%arg0: i32) -> (i32, i32, i32) {
    %c0_i32 = arith.constant 0 : i32
    %c0_i32_0 = arith.constant 0 : i32
    %c0_i32_1 = arith.constant 0 : i32
    return %arg0, %c0_i32, %c0_i32_0 : i32, i32, i32
  }
  func.func @transform_1(%arg0: i32) -> (i32, i32) {
    %c0_i32 = arith.constant 0 : i32
    %c0_i32_0 = arith.constant 0 : i32
    %c0_i32_1 = arith.constant 0 : i32
    return %c0_i32, %c0_i32_0 : i32, i32
  }
  func.func @transform_2(%arg0: i32) -> (i32, i32) {
    %c0_i32 = arith.constant 0 : i32
    %c0_i32_0 = arith.constant 0 : i32
    %c0_i32_1 = arith.constant 0 : i32
    return %c0_i32, %c0_i32_0 : i32, i32
  }
  func.func @transform_3(%arg0: i32) -> (i32, i32) {
    %c0_i32 = arith.constant 0 : i32
    %c0_i32_0 = arith.constant 0 : i32
    %c0_i32_1 = arith.constant 0 : i32
    return %c0_i32, %c0_i32_0 : i32, i32
  }
  func.func @transform_4(%arg0: i32) -> (i32, i32) {
    %c0_i32 = arith.constant 0 : i32
    %c0_i32_0 = arith.constant 0 : i32
    %c0_i32_1 = arith.constant 0 : i32
    return %c0_i32, %c0_i32_0 : i32, i32
  }
  func.func @transform_5(%arg0: i32) -> (i32, i32, i32) {
    %c0_i32 = arith.constant 0 : i32
    %c0_i32_0 = arith.constant 0 : i32
    %c0_i32_1 = arith.constant 0 : i32
    return %arg0, %c0_i32, %c0_i32_0 : i32, i32, i32
  }
}

</mosaic_0001>

<llo_original>
// kernel: se_layer.1
$region0: #{se_layer.1}
  #allocation0 [shape = 'u32[]', space=smem, size = 0x4, offset = 0x4, fixed_abs, tag = 'smem constant byte address 0x4 - core index']
  #allocation1 [shape = 'u32[144,128]{1,0:T(1,128)}', space=vmem, size = 0x12000, scoped, tag = 'internal scratch']
  %s0 = inlined_call_operand.vmem [shape: f32[2,32,256], index: 0, kind: input, shape index: {}]
  %s1 = inlined_call_operand.vmem [shape: f32[32,2], index: 1, kind: input, shape index: {}]
  %s2 = inlined_call_operand.vmem [shape: f32[1,2], index: 2, kind: input, shape index: {}]
  %s3 = inlined_call_operand.vmem [shape: f32[2,32], index: 3, kind: input, shape index: {}]
  %s4 = inlined_call_operand.vmem [shape: f32[1,32], index: 4, kind: input, shape index: {}]
  %s5 = inlined_call_operand.vmem [shape: f32[2,32,256], index: 5, kind: output, shape index: {}]
  %s6 = sld [smem:[#allocation0]]
  $region30: #{se_layer.1} parent=0
    _
  %s8 = ssub.s32 1, %s6
  %s9 = scalar_select 0, %s8, %s6
  // Predicated region
  $region2: #{se_layer.1} parent=0 // pred_check
    _
  $region3: #{se_layer.1} parent=0 // pred_check_branch
    %11 = sbr.rel (0) target = $region5
  $region4: #{se_layer.1} parent=0 // pred_region
    _
  $region5: #{se_layer.1} parent=0 // pred_fallthru
    _
  // Predicated region
  $region6: #{se_layer.1} parent=0 // pred_check
    _
  $region7: #{se_layer.1} parent=0 // pred_check_branch
    %13 = sbr.rel (0) target = $region9
  $region8: #{se_layer.1} parent=0 // pred_region
    _
  $region9: #{se_layer.1} parent=0 // pred_fallthru
    _
  // Predicated region
  $region10: #{se_layer.1} parent=0 // pred_check
    _
  $region11: #{se_layer.1} parent=0 // pred_check_branch
    %15 = sbr.rel (0) target = $region13
  $region12: #{se_layer.1} parent=0 // pred_region
    _
  $region13: #{se_layer.1} parent=0 // pred_fallthru
    _
  // Predicated region
  $region14: #{se_layer.1} parent=0 // pred_check
    _
  $region15: #{se_layer.1} parent=0 // pred_check_branch
    %17 = sbr.rel (0) target = $region17
  $region16: #{se_layer.1} parent=0 // pred_region
    _
  $region17: #{se_layer.1} parent=0 // pred_fallthru
    _
  // Predicated region
  $region18: #{se_layer.1} parent=0 // pred_check
    _
  $region19: #{se_layer.1} parent=0 // pred_check_branch
    %19 = sbr.rel (0) target = $region21
  $region20: #{se_layer.1} parent=0 // pred_region
    _
  $region21: #{se_layer.1} parent=0 // pred_fallthru
    _
  %v20 = vld [vmem:[%s0] sm:$0xff]
  %v21 = vld [vmem:[%s0 + $0x8] sm:$0xff]
  %v22 = vld [vmem:[%s0 + $0x10] sm:$0xff]
  %v23 = vld [vmem:[%s0 + $0x18] sm:$0xff]
  %v24 = vld [vmem:[%s0 + $0x20] sm:$0xff]
  %v25 = vld [vmem:[%s0 + $0x28] sm:$0xff]
  %v26 = vld [vmem:[%s0 + $0x30] sm:$0xff]
  %v27 = vld [vmem:[%s0 + $0x38] sm:$0xff]
  %v28 = vld [vmem:[%s0 + $0x40] sm:$0xff]
  %v29 = vld [vmem:[%s0 + $0x48] sm:$0xff]
  %v30 = vld [vmem:[%s0 + $0x50] sm:$0xff]
  %v31 = vld [vmem:[%s0 + $0x58] sm:$0xff]
  %v32 = vld [vmem:[%s0 + $0x60] sm:$0xff]
  %v33 = vld [vmem:[%s0 + $0x68] sm:$0xff]
  %v34 = vld [vmem:[%s0 + $0x70] sm:$0xff]
  %v35 = vld [vmem:[%s0 + $0x78] sm:$0xff]
  %v36 = vadd.f32 %v20, %v21
  %37 = vadd.xlane.f32.xlu0 %v36
  %v38 = vpop.xlane.xlu0 %37
  %v39 = vadd.f32 %v22, %v23
  %40 = vadd.xlane.f32.xlu0 %v39
  %v41 = vpop.xlane.xlu0 %40
  %v42 = vadd.f32 %v24, %v25
  %43 = vadd.xlane.f32.xlu0 %v42
  %v44 = vpop.xlane.xlu0 %43
  %v45 = vadd.f32 %v26, %v27
  %46 = vadd.xlane.f32.xlu0 %v45
  %v47 = vpop.xlane.xlu0 %46
  %v48 = vadd.f32 %v28, %v29
  %49 = vadd.xlane.f32.xlu0 %v48
  %v50 = vpop.xlane.xlu0 %49
  %v51 = vadd.f32 %v30, %v31
  %52 = vadd.xlane.f32.xlu0 %v51
  %v53 = vpop.xlane.xlu0 %52
  %v54 = vadd.f32 %v32, %v33
  %55 = vadd.xlane.f32.xlu0 %v54
  %v56 = vpop.xlane.xlu0 %55
  %v57 = vadd.f32 %v34, %v35
  %58 = vadd.xlane.f32.xlu0 %v57
  %v59 = vpop.xlane.xlu0 %58
  %v60 = vld [vmem:[%s1] sm:$0xff]
  %v61 = vld [vmem:[%s1 + $0x8] sm:$0xff]
  %v62 = vld [vmem:[%s1 + $0x10] sm:$0xff]
  %v63 = vld [vmem:[%s1 + $0x18] sm:$0xff]
  %v64 = vld [vmem:[%s2] sm:$0x1]
  %v65 = vld [vmem:[%s3] sm:$0x3]
  %v66 = vld [vmem:[%s4] sm:$0x1]
  %v68 = vlaneseq
  %v69 = vshrl.u32 %v68, 7
  %v70 = vsub.s32 0, %v69
  %v71 = vrot.slane %v64, %v70
  %v81 = vlaneseq
  %v82 = vand.u32 %v81, 127
  %v83 = vlaneseq
  %v84 = vshrl.u32 %v83, 7
  %v85 = vsub.s32 %v82, %v84
  %v86 = vrot.slane %v38, %v85
  %v87 = vadd.s32 %v82, 4294967288
  %v88 = vlaneseq
  %v89 = vshrl.u32 %v88, 7
  %v90 = vsub.s32 %v87, %v89
  %v91 = vrot.slane %v41, %v90
  %vm92 = vcmask 130112
  %v93 = vsel %vm92, %v91, %v86
  %v94 = vadd.s32 %v82, 4294967280
  %v95 = vlaneseq
  %v96 = vshrl.u32 %v95, 7
  %v97 = vsub.s32 %v94, %v96
  %v98 = vrot.slane %v44, %v97
  %vm99 = vcmask 195712
  %v100 = vsel %vm99, %v98, %v93
  %v101 = vadd.s32 %v82, 4294967272
  %v102 = vlaneseq
  %v103 = vshrl.u32 %v102, 7
  %v104 = vsub.s32 %v101, %v103
  %v105 = vrot.slane %v47, %v104
  %vm106 = vcmask 261312
  %v107 = vsel %vm106, %v105, %v100
  %v108 = vlaneseq
  %v109 = vshrl.u32 %v108, 7
  %v110 = vsub.s32 %v82, %v109
  %v111 = vrot.slane %v50, %v110
  %v112 = vlaneseq
  %v113 = vshrl.u32 %v112, 7
  %v114 = vsub.s32 %v87, %v113
  %v115 = vrot.slane %v53, %v114
  %v116 = vsel %vm92, %v115, %v111
  %v117 = vlaneseq
  %v118 = vshrl.u32 %v117, 7
  %v119 = vsub.s32 %v94, %v118
  %v120 = vrot.slane %v56, %v119
  %v121 = vsel %vm99, %v120, %v116
  %v122 = vlaneseq
  %v123 = vshrl.u32 %v122, 7
  %v124 = vsub.s32 %v101, %v123
  %v125 = vrot.slane %v59, %v124
  %v126 = vsel %vm106, %v125, %v121
  %vm127 = vcmask 1041409
  %v128 = vsel %vm127, %v126, %v107
  %vm129 = vcmask 261120
  %v130 = vsel %vm129, %v128, 0
  %132 = vmatprep.subr.mxu0 0.0
  %133 = vmatpush1.msra.mxu0 %v60
  %134 = vmatprep.subr.mxu0 0.0
  %135 = vmatpush1.msra.mxu0 %v61
  %136 = vmatprep.subr.mxu0 0.0
  %137 = vmatpush1.msra.mxu0 %v62
  %138 = vmatprep.subr.mxu0 0.0
  %139 = vmatpush1.msra.mxu0 %v63
  %140 = vmatprep.subr.mxu0 0.0
  %141 = vmatpush1.msra.mxu0 0.0
  %142 = vmatprep.subr.mxu0 0.0
  %143 = vmatpush1.msra.mxu0 0.0
  %144 = vmatprep.subr.mxu0 0.0
  %145 = vmatpush1.msra.mxu0 0.0
  %146 = vmatprep.subr.mxu0 0.0
  %147 = vmatpush1.msra.mxu0 0.0
  %148 = vmatprep.subr.mxu0 0.0
  %149 = vmatpush1.msra.mxu0 0.0
  %150 = vmatprep.subr.mxu0 0.0
  %151 = vmatpush1.msra.mxu0 0.0
  %152 = vmatprep.subr.mxu0 0.0
  %153 = vmatpush1.msra.mxu0 0.0
  %154 = vmatprep.subr.mxu0 0.0
  %155 = vmatpush1.msra.mxu0 0.0
  %156 = vmatprep.subr.mxu0 0.0
  %157 = vmatpush1.msra.mxu0 0.0
  %158 = vmatprep.subr.mxu0 0.0
  %159 = vmatpush1.msra.mxu0 0.0
  %160 = vmatprep.subr.mxu0 0.0
  %161 = vmatpush1.msra.mxu0 0.0
  %162 = vmatprep.subr.mxu0 0.0
  %163 = vmatpush1.msra.mxu0 0.0
  %164 = vmatprep.subr.mxu0 0.0
  %165 = vmatpush1.msra.mxu0 0.0
  %166 = vmatprep.subr.mxu0 0.0
  %167 = vmatpush1.msra.mxu0 0.0
  %168 = vmatprep.subr.mxu0 0.0
  %169 = vmatpush1.msra.mxu0 0.0
  %170 = vmatprep.subr.mxu0 0.0
  %171 = vmatpush1.msra.mxu0 0.0
  %172 = vmatprep.subr.mxu0 0.0
  %173 = vmatpush1.msra.mxu0 0.0
  %174 = vmatprep.subr.mxu0 0.0
  %175 = vmatpush1.msra.mxu0 0.0
  %176 = vmatprep.subr.mxu0 0.0
  %177 = vmatpush1.msra.mxu0 0.0
  %178 = vmatprep.subr.mxu0 0.0
  %179 = vmatpush1.msra.mxu0 0.0
  %180 = vmatprep.subr.mxu0 0.0
  %181 = vmatpush1.msra.mxu0 0.0
  %182 = vmatprep.subr.mxu0 0.0
  %183 = vmatpush1.msra.mxu0 0.0
  %184 = vmatprep.subr.mxu0 0.0
  %185 = vmatpush1.msra.mxu0 0.0
  %186 = vmatprep.subr.mxu0 0.0
  %187 = vmatpush1.msra.mxu0 0.0
  %188 = vmatprep.subr.mxu0 0.0
  %189 = vmatpush1.msra.mxu0 0.0
  %190 = vmatprep.subr.mxu0 0.0
  %191 = vmatpush1.msra.mxu0 0.0
  %192 = vmatprep.subr.mxu0 0.0
  %193 = vmatpush1.msra.mxu0 0.0
  %194 = vmatprep.subr.mxu0 0.0
  %195 = vmatpush1.msra.mxu0 0.0
  %196 = vmatprep.mubr.f32.mxu0 0.0
  %197 = vmatmul.mubr.f32.gmra.mrb[0].mxu0 %v130
  %v198 = vpop.f32.mrb[0].mxu0
  %v199 = vadd.f32 %v71, %v198
  %v200 = vpop.f32.mrb[0].mxu0
  %201 = vdwg.mxu0
  %v202 = vmax.f32 %v199, 0.0
  %v204 = vlaneseq
  %v205 = vshrl.u32 %v204, 7
  %v206 = vsub.s32 0, %v205
  %v207 = vrot.slane %v66, %v206
  %vm209 = vcmask 15360
  %v211 = vsel %vm209, %v202, 0
  %vm213 = vcmask 1041408
  %v215 = vsel %vm213, %v65, 0
  %217 = vmatprep.subr.mxu0 0.0
  %218 = vmatpush1.msra.mxu0 %v215
  %219 = vmatprep.subr.mxu0 0.0
  %220 = vmatpush1.msra.mxu0 0.0
  %221 = vmatprep.subr.mxu0 0.0
  %222 = vmatpush1.msra.mxu0 0.0
  %223 = vmatprep.subr.mxu0 0.0
  %224 = vmatpush1.msra.mxu0 0.0
  %225 = vmatprep.subr.mxu0 0.0
  %226 = vmatpush1.msra.mxu0 0.0
  %227 = vmatprep.subr.mxu0 0.0
  %228 = vmatpush1.msra.mxu0 0.0
  %229 = vmatprep.subr.mxu0 0.0
  %230 = vmatpush1.msra.mxu0 0.0
  %231 = vmatprep.subr.mxu0 0.0
  %232 = vmatpush1.msra.mxu0 0.0
  %233 = vmatprep.subr.mxu0 0.0
  %234 = vmatpush1.msra.mxu0 0.0
  %235 = vmatprep.subr.mxu0 0.0
  %236 = vmatpush1.msra.mxu0 0.0
  %237 = vmatprep.subr.mxu0 0.0
  %238 = vmatpush1.msra.mxu0 0.0
  %239 = vmatprep.subr.mxu0 0.0
  %240 = vmatpush1.msra.mxu0 0.0
  %241 = vmatprep.subr.mxu0 0.0
  %242 = vmatpush1.msra.mxu0 0.0
  %243 = vmatprep.subr.mxu0 0.0
  %244 = vmatpush1.msra.mxu0 0.0
  %245 = vmatprep.subr.mxu0 0.0
  %246 = vmatpush1.msra.mxu0 0.0
  %247 = vmatprep.subr.mxu0 0.0
  %248 = vmatpush1.msra.mxu0 0.0
  %249 = vmatprep.subr.mxu0 0.0
  %250 = vmatpush1.msra.mxu0 0.0
  %251 = vmatprep.subr.mxu0 0.0
  %252 = vmatpush1.msra.mxu0 0.0
  %253 = vmatprep.subr.mxu0 0.0
  %254 = vmatpush1.msra.mxu0 0.0
  %255 = vmatprep.subr.mxu0 0.0
  %256 = vmatpush1.msra.mxu0 0.0
  %257 = vmatprep.subr.mxu0 0.0
  %258 = vmatpush1.msra.mxu0 0.0
  %259 = vmatprep.subr.mxu0 0.0
  %260 = vmatpush1.msra.mxu0 0.0
  %261 = vmatprep.subr.mxu0 0.0
  %262 = vmatpush1.msra.mxu0 0.0
  %263 = vmatprep.subr.mxu0 0.0
  %264 = vmatpush1.msra.mxu0 0.0
  %265 = vmatprep.subr.mxu0 0.0
  %266 = vmatpush1.msra.mxu0 0.0
  %267 = vmatprep.subr.mxu0 0.0
  %268 = vmatpush1.msra.mxu0 0.0
  %269 = vmatprep.subr.mxu0 0.0
  %270 = vmatpush1.msra.mxu0 0.0
  %271 = vmatprep.subr.mxu0 0.0
  %272 = vmatpush1.msra.mxu0 0.0
  %273 = vmatprep.subr.mxu0 0.0
  %274 = vmatpush1.msra.mxu0 0.0
  %275 = vmatprep.subr.mxu0 0.0
  %276 = vmatpush1.msra.mxu0 0.0
  %277 = vmatprep.subr.mxu0 0.0
  %278 = vmatpush1.msra.mxu0 0.0
  %279 = vmatprep.subr.mxu0 0.0
  %280 = vmatpush1.msra.mxu0 0.0
  %281 = vmatprep.mubr.f32.mxu0 0.0
  %282 = vmatmul.mubr.f32.gmra.mrb[0].mxu0 %v211
  %v283 = vpop.f32.mrb[0].mxu0
  %v284 = vadd.f32 %v207, %v283
  %v285 = vpop.f32.mrb[0].mxu0
  %286 = vdwg.mxu0
  %v287 = vxor.u32 %v284, 2147483648
  %v288 = vmul.f32 %v287, 1.442695
  %v289 = vpow.pop %v288
  %v290 = vadd.f32 %v289, 1.0
  %v291 = vrcp.pop %v290
  %v292 = vmul.f32 1.0, %v291
  %v293 = vlaneseq
  %v294 = vshrl.u32 %v293, 7
  %v295 = vsub.s32 0, %v294
  %v296 = vrot.slane %v292, %v295
  %298 = vbcast.lane.b32.xlu0 %v296, 256
  %v299 = vpop.permute.xlu0 %298
  %s301 = sor.u32 256, 8
  %302 = vbcast.lane.b32.xlu0 %v296, %s301
  %v303 = vpop.permute.xlu0 %302
  %s305 = sor.u32 256, 16
  %306 = vbcast.lane.b32.xlu0 %v296, %s305
  %v307 = vpop.permute.xlu0 %306
  %s309 = sor.u32 256, 24
  %310 = vbcast.lane.b32.xlu0 %v296, %s309
  %v311 = vpop.permute.xlu0 %310
  %v312 = vlaneseq
  %v313 = vshrl.u32 %v312, 7
  %v314 = vsub.s32 1, %v313
  %v315 = vrot.slane %v292, %v314
  %317 = vbcast.lane.b32.xlu0 %v315, 256
  %v318 = vpop.permute.xlu0 %317
  %s320 = sor.u32 256, 8
  %321 = vbcast.lane.b32.xlu0 %v315, %s320
  %v322 = vpop.permute.xlu0 %321
  %s324 = sor.u32 256, 16
  %325 = vbcast.lane.b32.xlu0 %v315, %s324
  %v326 = vpop.permute.xlu0 %325
  %s328 = sor.u32 256, 24
  %329 = vbcast.lane.b32.xlu0 %v315, %s328
  %v330 = vpop.permute.xlu0 %329
  %v331 = vmul.f32 %v20, %v299
  %v332 = vmul.f32 %v21, %v299
  %v333 = vmul.f32 %v22, %v303
  %v334 = vmul.f32 %v23, %v303
  %v335 = vmul.f32 %v24, %v307
  %v336 = vmul.f32 %v25, %v307
  %v337 = vmul.f32 %v26, %v311
  %v338 = vmul.f32 %v27, %v311
  %v339 = vmul.f32 %v28, %v318
  %v340 = vmul.f32 %v29, %v318
  %v341 = vmul.f32 %v30, %v322
  %v342 = vmul.f32 %v31, %v322
  %v343 = vmul.f32 %v32, %v326
  %v344 = vmul.f32 %v33, %v326
  %v345 = vmul.f32 %v34, %v330
  %v346 = vmul.f32 %v35, %v330
  %347 = vst [vmem:[%s5] sm:$0xff] %v331
  %348 = vst [vmem:[%s5 + $0x8] sm:$0xff] %v332
  %349 = vst [vmem:[%s5 + $0x10] sm:$0xff] %v333
  %350 = vst [vmem:[%s5 + $0x18] sm:$0xff] %v334
  %351 = vst [vmem:[%s5 + $0x20] sm:$0xff] %v335
  %352 = vst [vmem:[%s5 + $0x28] sm:$0xff] %v336
  %353 = vst [vmem:[%s5 + $0x30] sm:$0xff] %v337
  %354 = vst [vmem:[%s5 + $0x38] sm:$0xff] %v338
  %355 = vst [vmem:[%s5 + $0x40] sm:$0xff] %v339
  %356 = vst [vmem:[%s5 + $0x48] sm:$0xff] %v340
  %357 = vst [vmem:[%s5 + $0x50] sm:$0xff] %v341
  %358 = vst [vmem:[%s5 + $0x58] sm:$0xff] %v342
  %359 = vst [vmem:[%s5 + $0x60] sm:$0xff] %v343
  %360 = vst [vmem:[%s5 + $0x68] sm:$0xff] %v344
  %361 = vst [vmem:[%s5 + $0x70] sm:$0xff] %v345
  %362 = vst [vmem:[%s5 + $0x78] sm:$0xff] %v346
  // Predicated region
  $region22: #{se_layer.1} parent=0 // pred_check
    _
  $region23: #{se_layer.1} parent=0 // pred_check_branch
    %364 = sbr.rel (0) target = $region25
  $region24: #{se_layer.1} parent=0 // pred_region
    _
  $region25: #{se_layer.1} parent=0 // pred_fallthru
    _
  // Predicated region
  $region26: #{se_layer.1} parent=0 // pred_check
    _
  $region27: #{se_layer.1} parent=0 // pred_check_branch
    %366 = sbr.rel (0) target = $region29
  $region28: #{se_layer.1} parent=0 // pred_region
    _
  $region29: #{se_layer.1} parent=0 // pred_fallthru
    _

</llo_original>
